<compile_context>
chip_gen: v5e
topology: v5e:2x2
jax: 0.10.0
libtpu: 0.0.40
codegen_flags: <defaults>
</compile_context>

<pallas_src>
import jax
import jax.numpy as jnp
from jax.experimental import pallas as pl
from jax.experimental.pallas import tpu as pltpu


def _vq_kernel(x_ref, et_neg2_ref, e_ref, en_ref, xq_ref, loss_ref):
    x = x_ref[...].astype(jnp.float32)                                     # (TM, D)

    # -2 * x.e^T in one MXU matmul (scale folded into the hoisted operand).
    neg2_scores = jnp.dot(x, et_neg2_ref[...],
                          preferred_element_type=jnp.float32)             # (TM, Kp)

    # squared-distance surrogate (||x||^2 dropped; same argmin as cdist).
    # Padded codebook columns have ||e||^2 = 1e30 so they never win argmin.
    dist = neg2_scores + en_ref[...]                                       # (TM, Kp)

    idx = jnp.argmin(dist, axis=1, keepdims=True)                          # (TM, 1)

    # gather codebook rows via one-hot matmul (MXU-friendly, no scalar loads)
    onehot = (jax.lax.broadcasted_iota(jnp.int32, dist.shape, 1) == idx)
    onehot = onehot.astype(jnp.float32)                                    # (TM, Kp)
    xq = jnp.dot(onehot, e_ref[...], preferred_element_type=jnp.float32)   # (TM, D)

    xq_ref[...] = xq.astype(xq_ref.dtype)

    # per-tile partial loss: sum of squared differences, splat into this
    # step's own (1, 8, 128) output slab (wrapper reads element [i, 0, 0]).
    diff = xq - x
    loss_ref[...] = jnp.full_like(loss_ref, jnp.sum(diff * diff))


def _pick_row_tile(n, max_tm=4096):
    """Largest multiple-of-8 divisor of n that is <= max_tm and leaves >= 2
    grid steps (so the row axis can shard across 2 TensorCores on v7x).
    Falls back to a single full-array block (always layout-legal)."""
    best = 0
    for t in range(1, min(n, max_tm) + 1):
        if n % t == 0 and t % 8 == 0 and n // t >= 2:
            best = t
    if best == 0:
        best = n
    return best


def vector_quantizer_forward(x_nchw, codebook, beta=0.25, training=True, max_tm=4096):
    """Pallas implementation of VectorQuantizer.forward.

    Args:
      x_nchw:   (B, D, H, W) float32 input (PyTorch NCHW convention).
      codebook: (K, D) float32 embedding table.
    Returns:
      (x_q_nchw, loss) -- loss is None when training=False.
    """
    B, C, H, W = x_nchw.shape
    K, D = codebook.shape
    assert C == D, f'Number of embeddings must be "{D}".'

    # NCHW -> NHWC -> (N, D); D becomes the lane axis.
    x_flat = jnp.transpose(x_nchw, (0, 2, 3, 1)).reshape(-1, D)
    N = x_flat.shape[0]

    tm = _pick_row_tile(N, max_tm)
    G = N // tm

    # --- hoisted, grid-invariant codebook prep -------------------------------
    # Pad K up to a lane-dense multiple of 128.
    Kp = max(128, ((K + 127) // 128) * 128)
    cb32 = codebook.astype(jnp.float32)
    e_pad = jnp.zeros((Kp, D), jnp.float32).at[:K, :].set(cb32)            # (Kp, D)
    e_t_neg2 = (-2.0) * e_pad.T                                            # (D, Kp)
    e_norm = jnp.full((1, Kp), 1e30, jnp.float32).at[:, :K].set(
        jnp.sum(cb32 * cb32, axis=1)[None, :])                             # (1, Kp)

    xq_flat, loss_slab = pl.pallas_call(
        _vq_kernel,
        out_shape=(
            jax.ShapeDtypeStruct((N, D), x_flat.dtype),
            jax.ShapeDtypeStruct((G, 8, 128), jnp.float32),
        ),
        grid_spec=pltpu.PrefetchScalarGridSpec(
            num_scalar_prefetch=0,
            grid=(G,),
            in_specs=[
                pl.BlockSpec((tm, D), lambda i: (i, 0)),   # row tile of x
                pl.BlockSpec((D, Kp), lambda i: (0, 0)),   # -2 * codebook^T, resident
                pl.BlockSpec((Kp, D), lambda i: (0, 0)),   # codebook,        resident
                pl.BlockSpec((1, Kp), lambda i: (0, 0)),   # ||e||^2,         resident
            ],
            out_specs=[
                pl.BlockSpec((tm, D), lambda i: (i, 0)),        # quantized rows
                pl.BlockSpec((1, 8, 128), lambda i: (i, 0, 0)), # per-tile loss slab
            ],
        ),
        compiler_params=pltpu.CompilerParams(
            dimension_semantics=("parallel",)),   # no cross-step state -> megacore OK
    )(x_flat, e_t_neg2, e_pad, e_norm)

    xq_nhwc = xq_flat.reshape(B, H, W, D)
    # straight-through estimator: x + (x_q - x).detach() has forward value x_q
    xq_nchw = jnp.transpose(xq_nhwc, (0, 3, 1, 2))

    if training:
        loss_sum = jnp.sum(loss_slab[:, 0, 0])
        mean_sq = loss_sum / jnp.float32(N * D)
        # mean((xq.detach()-x)^2) + beta*mean((xq-x.detach())^2) == (1+beta)*mean((xq-x)^2)
        loss = (1.0 + beta) * mean_sq
    else:
        loss = None
    return xq_nchw, loss


if __name__ == "__main__":
    # Module configuration (deterministic synthetic parameters).
    num_embeddings = 64
    embed_dim = 32
    beta = 0.25

    key = jax.random.PRNGKey(0)
    k_emb, k_x = jax.random.split(key)

    # nn.Embedding weight ~ U(-1/K, 1/K), shape (K, D)
    codebook = jax.random.uniform(
        k_emb, (num_embeddings, embed_dim),
        minval=-1.0 / num_embeddings, maxval=1.0 / num_embeddings,
        dtype=jnp.float32)

    # Input in PyTorch NCHW convention: (B, embed_dim, H, W)
    B, H, W = 2, 16, 16
    x = jax.random.normal(k_x, (B, embed_dim, H, W), dtype=jnp.float32) * 0.05

    x_q, loss = vector_quantizer_forward(x, codebook, beta=beta, training=True)
    jax.block_until_ready(x_q)
    jax.block_until_ready(loss)

    # light sanity checks against a pure-JAX reference
    x_flat = jnp.transpose(x, (0, 2, 3, 1)).reshape(-1, embed_dim)
    d2 = (jnp.sum(x_flat**2, 1, keepdims=True)
          - 2.0 * x_flat @ codebook.T
          + jnp.sum(codebook**2, 1)[None, :])
    idx_ref = jnp.argmin(d2, axis=1)
    xq_ref = codebook[idx_ref].reshape(B, H, W, embed_dim).transpose(0, 3, 1, 2)
    loss_ref = (1.0 + beta) * jnp.mean((xq_ref - x) ** 2)
    assert jnp.allclose(x_q, xq_ref, atol=1e-5), "x_q mismatch"
    assert jnp.allclose(loss, loss_ref, atol=1e-5), "loss mismatch"

    print("KERNEL_OK")
</pallas_src>

<mosaic_0001>
module attributes {stable_mosaic.version = 11 : i64} {
  func.func @_vq_kernel(%arg0: i32, %arg1: memref<256x32xf32, #tpu.memory_space<vmem>>, %arg2: memref<32x128xf32, #tpu.memory_space<vmem>>, %arg3: memref<128x32xf32, #tpu.memory_space<vmem>>, %arg4: memref<1x128xf32, #tpu.memory_space<vmem>>, %arg5: memref<256x32xf32, #tpu.memory_space<vmem>>, %arg6: memref<1x8x128xf32, #tpu.memory_space<vmem>>) attributes {dimension_semantics = [#tpu.dimension_semantics<parallel>], iteration_bounds = array<i64: 2>, scalar_prefetch = 0 : i64, scratch_operands = 0 : i64, tpu.core_type = #tpu.core_type<tc>, window_params = [{transform_indices = @transform_0, window_bounds = array<i64: 256, 32>}, {pipeline_mode = #tpu.pipeline_mode<synchronous>, transform_indices = @transform_1, window_bounds = array<i64: 32, 128>}, {pipeline_mode = #tpu.pipeline_mode<synchronous>, transform_indices = @transform_2, window_bounds = array<i64: 128, 32>}, {pipeline_mode = #tpu.pipeline_mode<synchronous>, transform_indices = @transform_3, window_bounds = array<i64: 1, 128>}, {transform_indices = @transform_4, window_bounds = array<i64: 256, 32>}, {transform_indices = @transform_5, window_bounds = array<i64: 1, 8, 128>}]} {
    %c0 = arith.constant 0 : index
    %c0_0 = arith.constant 0 : index
    %0 = vector.load %arg1[%c0, %c0_0] : memref<256x32xf32, #tpu.memory_space<vmem>>, vector<256x32xf32>
    %c0_1 = arith.constant 0 : index
    %c0_2 = arith.constant 0 : index
    %1 = vector.load %arg2[%c0_1, %c0_2] : memref<32x128xf32, #tpu.memory_space<vmem>>, vector<32x128xf32>
    %cst = arith.constant dense<0.000000e+00> : vector<256x128xf32>
    %2 = tpu.matmul %0, %1, %cst {dimension_numbers = #tpu.dot_dimension_numbers<[1], [0], [0], [1], [0, 0, 1, 1], [], []>} : vector<256x32xf32>, vector<32x128xf32>, vector<256x128xf32> -> vector<256x128xf32>
    %c0_3 = arith.constant 0 : index
    %c0_4 = arith.constant 0 : index
    %3 = vector.load %arg4[%c0_3, %c0_4] : memref<1x128xf32, #tpu.memory_space<vmem>>, vector<1x128xf32>
    %4 = vector.broadcast %3 : vector<1x128xf32> to vector<256x128xf32>
    %5 = arith.addf %2, %4 : vector<256x128xf32>
    %6 = tpu.reduce_index %5 {axis = 1 : i32, kind = #tpu.reduction_kind<arg_min>} : vector<256x128xf32> -> vector<256xi32>
    %7 = vector.shape_cast %6 : vector<256xi32> to vector<256x1xi32>
    %8 = tpu.iota {dimensions = array<i32: 1>} : vector<256x128xi32>
    %9 = vector.broadcast %7 : vector<256x1xi32> to vector<256x128xi32>
    %10 = arith.cmpi eq, %8, %9 : vector<256x128xi32>
    %11 = arith.extui %10 : vector<256x128xi1> to vector<256x128xi32>
    %12 = arith.sitofp %11 : vector<256x128xi32> to vector<256x128xf32>
    %c0_5 = arith.constant 0 : index
    %c0_6 = arith.constant 0 : index
    %13 = vector.load %arg3[%c0_5, %c0_6] : memref<128x32xf32, #tpu.memory_space<vmem>>, vector<128x32xf32>
    %cst_7 = arith.constant dense<0.000000e+00> : vector<256x32xf32>
    %14 = tpu.matmul %12, %13, %cst_7 {dimension_numbers = #tpu.dot_dimension_numbers<[1], [0], [0], [1], [0, 0, 1, 1], [], []>} : vector<256x128xf32>, vector<128x32xf32>, vector<256x32xf32> -> vector<256x32xf32>
    %c0_8 = arith.constant 0 : index
    %c0_9 = arith.constant 0 : index
    %15 = vector.load %arg5[%c0_8, %c0_9] : memref<256x32xf32, #tpu.memory_space<vmem>>, vector<256x32xf32>
    tpu.vector_store %arg5[%c0_8, %c0_9], %14 {strides = array<i32>} : memref<256x32xf32, #tpu.memory_space<vmem>>, vector<256x32xf32>,
    %16 = arith.subf %14, %0 : vector<256x32xf32>
    %17 = arith.mulf %16, %16 : vector<256x32xf32>
    %18 = vector.shape_cast %17 : vector<256x32xf32> to vector<1x256x32xf32>
    %cst_10 = arith.constant dense<0.000000e+00> : vector<1xf32>
    %19 = vector.multi_reduction <add>, %18, %cst_10 [1, 2] : vector<1x256x32xf32> to vector<1xf32>
    %20 = vector.shape_cast %19 : vector<1xf32> to vector<1x1x1xf32>
    %21 = vector.extract %20[0, 0, 0] : f32 from vector<1x1x1xf32>
    %22 = vector.broadcast %21 : f32 to vector<1x8x128xf32>
    %c0_11 = arith.constant 0 : index
    %c0_12 = arith.constant 0 : index
    %c0_13 = arith.constant 0 : index
    %23 = vector.load %arg6[%c0_11, %c0_12, %c0_13] : memref<1x8x128xf32, #tpu.memory_space<vmem>>, vector<1x8x128xf32>
    tpu.vector_store %arg6[%c0_11, %c0_12, %c0_13], %22 {strides = array<i32>} : memref<1x8x128xf32, #tpu.memory_space<vmem>>, vector<1x8x128xf32>,
    return
  }
  func.func @transform_0(%arg0: i32) -> (i32, i32) {
    %c0_i32 = arith.constant 0 : i32
    %c0_i32_0 = arith.constant 0 : i32
    return %arg0, %c0_i32 : i32, i32
  }
  func.func @transform_1(%arg0: i32) -> (i32, i32) {
    %c0_i32 = arith.constant 0 : i32
    %c0_i32_0 = arith.constant 0 : i32
    %c0_i32_1 = arith.constant 0 : i32
    return %c0_i32, %c0_i32_0 : i32, i32
  }
  func.func @transform_2(%arg0: i32) -> (i32, i32) {
    %c0_i32 = arith.constant 0 : i32
    %c0_i32_0 = arith.constant 0 : i32
    %c0_i32_1 = arith.constant 0 : i32
    return %c0_i32, %c0_i32_0 : i32, i32
  }
  func.func @transform_3(%arg0: i32) -> (i32, i32) {
    %c0_i32 = arith.constant 0 : i32
    %c0_i32_0 = arith.constant 0 : i32
    %c0_i32_1 = arith.constant 0 : i32
    return %c0_i32, %c0_i32_0 : i32, i32
  }
  func.func @transform_4(%arg0: i32) -> (i32, i32) {
    %c0_i32 = arith.constant 0 : i32
    %c0_i32_0 = arith.constant 0 : i32
    return %arg0, %c0_i32 : i32, i32
  }
  func.func @transform_5(%arg0: i32) -> (i32, i32, i32) {
    %c0_i32 = arith.constant 0 : i32
    %c0_i32_0 = arith.constant 0 : i32
    %c0_i32_1 = arith.constant 0 : i32
    return %arg0, %c0_i32, %c0_i32_0 : i32, i32, i32
  }
}

</mosaic_0001>

<llo_original>
// kernel: tpu_custom_call.1
$region0: #{tpu_custom_call.1}
  #allocation0 [shape = 'u32[]', space=smem, size = 0x4, offset = 0x4, fixed_abs, tag = 'smem constant byte address 0x4 - core index']
  #allocation1 [shape = 'u32[72,128]{1,0:T(1,128)}', space=vmem, size = 0x9000, scoped, tag = 'internal scratch']
  %s0 = inlined_call_operand.vmem [shape: f32[512,32], index: 0, kind: input, shape index: {}]
  %s1 = inlined_call_operand.vmem [shape: f32[32,128], index: 1, kind: input, shape index: {}]
  %s2 = inlined_call_operand.vmem [shape: f32[128,32], index: 2, kind: input, shape index: {}]
  %s3 = inlined_call_operand.vmem [shape: f32[1,128], index: 3, kind: input, shape index: {}]
  %s4 = inlined_call_operand.vmem [shape: f32[512,32], index: 4, kind: output, shape index: {0}]
  %s5 = inlined_call_operand.hbm [shape: f32[2,8,128], index: 5, kind: output, shape index: {1}]
  %6 = xla_tuple %s4, %s5
  %s7 = sld [smem:[#allocation0]]
  $region57: #{tpu_custom_call.1} parent=0
    _
  %s9 = ssub.s32 1, %s7
  %s10 = scalar_select 0, %s9, %s7
  $region1: #{tpu_custom_call.1} parent=0
    #allocation2 [shape = 'u8[8192]{0}', space=vmem, size = 0x2000, scoped, tag = 'output window, operand 1']
    #allocation3 [shape = 's32[2]{0}', space=sflag, size = 0x8, scoped, tag = 'scoped memory for tpu_custom_call.1']
    %11 = vsyncpa [#allocation3], 0
    %s12 = scalar_lea.sflag [#allocation3], 1
    %13 = vsyncpa %s12, 0
    loop: start=0, step=1, limit=4
    $region2: #{tpu_custom_call.1} parent=1 // loop_pre_header
      _
    $region3: #{tpu_custom_call.1} parent=1 // loop_header
      %s15 = sphi 0, %s19
      %p16 = scmp.ge.s32.totalorder %s15, 4
      %s25 = sphi 0, %s27
      %s28 = sphi 0, %s25
      %s29 = sphi 0, %s28
      %s45 = sphi 0, %s29
      %s49 = sphi 0, %s49
      %s51 = sphi 0, %s49
      %s52 = sphi 0, %s51
      %s66 = sphi 0, %s52
      %s70 = sphi 0, %s70
      %s72 = sphi 0, %s70
      %s73 = sphi 0, %s72
      %s87 = sphi 0, %s73
      %s91 = sphi 0, %s91
      %s93 = sphi 0, %s91
      %s94 = sphi 0, %s93
      %s108 = sphi 0, %s94
      %s114 = sphi 0, %s116
      %s117 = sphi 0, %s114
      %s118 = sphi 0, %s117
      %s134 = sphi 0, %s118
      %s140 = sphi 0, %s142
      %s143 = sphi 0, %s140
      %s144 = sphi 0, %s143
      %s160 = sphi 0, %s144
    $region4: #{tpu_custom_call.1} parent=1 // loop_header_branch
      %18 = sbr.rel (%p16) target = $region8
    $region5: #{tpu_custom_call.1} parent=1 // loop_body
      %s20 = ssub.s32 %s15, 1
      %s21 = ssub.s32 %s15, 2
      %s22 = sadd.s32 %s15, 1
      %s23 = ssub.s32 %s15, %s22
      %p24 = scmp.eq.s32.totalorder %s23, 0
      %s26 = sadd.s32 %s25, 1
      %s27 = scalar_select %p24, %s25, %s26
      %p30 = pneg %p24
      %p31 = scmp.eq.s32.totalorder %s15, 1
      %p32 = por %p30, %p31
      %p33 = scmp.ne.s32.totalorder %s25, %s28
      %p34 = scmp.eq.s32.totalorder %s15, 0
      %p35 = por %p33, %p34
      %p36 = scmp.ne.s32.totalorder %s25, %s28
      %p37 = scmp.eq.s32.totalorder %s20, 1
      %p38 = por %p36, %p37
      %p39 = scmp.ne.s32.totalorder %s28, %s29
      %p40 = scmp.eq.s32.totalorder %s20, 0
      %p41 = por %p39, %p40
      %p42 = scmp.ne.s32.totalorder %s28, %s29
      %p43 = scmp.eq.s32.totalorder %s21, 1
      %p44 = por %p42, %p43
      %p46 = scmp.ne.s32.totalorder %s29, %s45
      %p47 = scmp.eq.s32.totalorder %s21, 0
      %p48 = por %p46, %p47
      %s50 = sadd.s32 %s49, 1
      %p53 = scmp.eq.s32.totalorder %s15, 1
      %p54 = scmp.ne.s32.totalorder %s49, %s51
      %p55 = scmp.eq.s32.totalorder %s15, 0
      %p56 = por %p54, %p55
      %p57 = scmp.ne.s32.totalorder %s49, %s51
      %p58 = scmp.eq.s32.totalorder %s20, 1
      %p59 = por %p57, %p58
      %p60 = scmp.ne.s32.totalorder %s51, %s52
      %p61 = scmp.eq.s32.totalorder %s20, 0
      %p62 = por %p60, %p61
      %p63 = scmp.ne.s32.totalorder %s51, %s52
      %p64 = scmp.eq.s32.totalorder %s21, 1
      %p65 = por %p63, %p64
      %p67 = scmp.ne.s32.totalorder %s52, %s66
      %p68 = scmp.eq.s32.totalorder %s21, 0
      %p69 = por %p67, %p68
      %s71 = sadd.s32 %s70, 1
      %p74 = scmp.eq.s32.totalorder %s15, 1
      %p75 = scmp.ne.s32.totalorder %s70, %s72
      %p76 = scmp.eq.s32.totalorder %s15, 0
      %p77 = por %p75, %p76
      %p78 = scmp.ne.s32.totalorder %s70, %s72
      %p79 = scmp.eq.s32.totalorder %s20, 1
      %p80 = por %p78, %p79
      %p81 = scmp.ne.s32.totalorder %s72, %s73
      %p82 = scmp.eq.s32.totalorder %s20, 0
      %p83 = por %p81, %p82
      %p84 = scmp.ne.s32.totalorder %s72, %s73
      %p85 = scmp.eq.s32.totalorder %s21, 1
      %p86 = por %p84, %p85
      %p88 = scmp.ne.s32.totalorder %s73, %s87
      %p89 = scmp.eq.s32.totalorder %s21, 0
      %p90 = por %p88, %p89
      %s92 = sadd.s32 %s91, 1
      %p95 = scmp.eq.s32.totalorder %s15, 1
      %p96 = scmp.ne.s32.totalorder %s91, %s93
      %p97 = scmp.eq.s32.totalorder %s15, 0
      %p98 = por %p96, %p97
      %p99 = scmp.ne.s32.totalorder %s91, %s93
      %p100 = scmp.eq.s32.totalorder %s20, 1
      %p101 = por %p99, %p100
      %p102 = scmp.ne.s32.totalorder %s93, %s94
      %p103 = scmp.eq.s32.totalorder %s20, 0
      %p104 = por %p102, %p103
      %p105 = scmp.ne.s32.totalorder %s93, %s94
      %p106 = scmp.eq.s32.totalorder %s21, 1
      %p107 = por %p105, %p106
      %p109 = scmp.ne.s32.totalorder %s94, %s108
      %p110 = scmp.eq.s32.totalorder %s21, 0
      %p111 = por %p109, %p110
      %s112 = ssub.s32 %s15, %s22
      %p113 = scmp.eq.s32.totalorder %s112, 0
      %s115 = sadd.s32 %s114, 1
      %s116 = scalar_select %p113, %s114, %s115
      %p119 = pneg %p113
      %p120 = scmp.eq.s32.totalorder %s15, 1
      %p121 = por %p119, %p120
      %p122 = scmp.ne.s32.totalorder %s114, %s117
      %p123 = scmp.eq.s32.totalorder %s15, 0
      %p124 = por %p122, %p123
      %p125 = scmp.ne.s32.totalorder %s114, %s117
      %p126 = scmp.eq.s32.totalorder %s20, 1
      %p127 = por %p125, %p126
      %p128 = scmp.ne.s32.totalorder %s117, %s118
      %p129 = scmp.eq.s32.totalorder %s20, 0
      %p130 = por %p128, %p129
      %p131 = scmp.ne.s32.totalorder %s117, %s118
      %p132 = scmp.eq.s32.totalorder %s21, 1
      %p133 = por %p131, %p132
      %p135 = scmp.ne.s32.totalorder %s118, %s134
      %p136 = scmp.eq.s32.totalorder %s21, 0
      %p137 = por %p135, %p136
      %s138 = ssub.s32 %s15, %s22
      %p139 = scmp.eq.s32.totalorder %s138, 0
      %s141 = sadd.s32 %s140, 1
      %s142 = scalar_select %p139, %s140, %s141
      %p145 = pneg %p139
      %p146 = scmp.eq.s32.totalorder %s15, 1
      %p147 = por %p145, %p146
      %p148 = scmp.ne.s32.totalorder %s140, %s143
      %p149 = scmp.eq.s32.totalorder %s15, 0
      %p150 = por %p148, %p149
      %p151 = scmp.ne.s32.totalorder %s140, %s143
      %p152 = scmp.eq.s32.totalorder %s20, 1
      %p153 = por %p151, %p152
      %p154 = scmp.ne.s32.totalorder %s143, %s144
      %p155 = scmp.eq.s32.totalorder %s20, 0
      %p156 = por %p154, %p155
      %p157 = scmp.ne.s32.totalorder %s143, %s144
      %p158 = scmp.eq.s32.totalorder %s21, 1
      %p159 = por %p157, %p158
      %p161 = scmp.ne.s32.totalorder %s144, %s160
      %p162 = scmp.eq.s32.totalorder %s21, 0
      %p163 = por %p161, %p162
      %p164 = scmp.le.s32.totalorder 1, %s15
      %p165 = scmp.lt.s32.totalorder %s15, 3
      %p166 = pnand %p164, %p165
      %p167 = pneg %p166
      // Predicated region
      $region9: #{tpu_custom_call.1} parent=5 // pred_check
        _
      $region10: #{tpu_custom_call.1} parent=5 // pred_check_branch
        %169 = sbr.rel (%p166) target = $region12
      $region11: #{tpu_custom_call.1} parent=5 // pred_region
        %s170 = ssub.s32 %s15, 1
        // Predicated region
        $region13: #{tpu_custom_call.1} parent=11 // pred_check
          %p171 = pneg %p62
        $region14: #{tpu_custom_call.1} parent=11 // pred_check_branch
          %173 = sbr.rel (%p171) target = $region16
        $region15: #{tpu_custom_call.1} parent=11 // pred_region
          _
        $region16: #{tpu_custom_call.1} parent=11 // pred_fallthru
          _
        // Predicated region
        $region17: #{tpu_custom_call.1} parent=11 // pred_check
          %p174 = pneg %p83
        $region18: #{tpu_custom_call.1} parent=11 // pred_check_branch
          %176 = sbr.rel (%p174) target = $region20
        $region19: #{tpu_custom_call.1} parent=11 // pred_region
          _
        $region20: #{tpu_custom_call.1} parent=11 // pred_fallthru
          _
        // Predicated region
        $region21: #{tpu_custom_call.1} parent=11 // pred_check
          %p177 = pneg %p104
        $region22: #{tpu_custom_call.1} parent=11 // pred_check_branch
          %179 = sbr.rel (%p177) target = $region24
        $region23: #{tpu_custom_call.1} parent=11 // pred_region
          _
        $region24: #{tpu_custom_call.1} parent=11 // pred_fallthru
          _
      $region12: #{tpu_custom_call.1} parent=5 // pred_fallthru
        _
      %p180 = scmp.lt.s32.totalorder %s15, 2
      // Predicated region
      $region25: #{tpu_custom_call.1} parent=5 // pred_check
        %p181 = pneg %p180
      $region26: #{tpu_custom_call.1} parent=5 // pred_check_branch
        %183 = sbr.rel (%p181) target = $region28
      $region27: #{tpu_custom_call.1} parent=5 // pred_region
        // Predicated region
        $region29: #{tpu_custom_call.1} parent=27 // pred_check
          %p184 = pneg %p35
        $region30: #{tpu_custom_call.1} parent=27 // pred_check_branch
          %186 = sbr.rel (%p184) target = $region32
        $region31: #{tpu_custom_call.1} parent=27 // pred_region
          %s187 = smul.u32 32, %s15
          %p188 = scmp.lt.s32.totalorder %s187, 63
          %s189 = scalar_select %p188, %s187, 63
          %s190 = smul.addr %s189, 8
          %s191 = scalar_lea.vmem %s0, %s190
          %s192 = smul.u32 32, %s15
        $region32: #{tpu_custom_call.1} parent=27 // pred_fallthru
          _
      $region28: #{tpu_custom_call.1} parent=5 // pred_fallthru
        _
      %p193 = scmp.le.s32.totalorder 1, %s15
      %p194 = scmp.lt.s32.totalorder %s15, 3
      %p195 = pnand %p193, %p194
      %p196 = pneg %p195
      // Predicated region
      $region33: #{tpu_custom_call.1} parent=5 // pred_check
        _
      $region34: #{tpu_custom_call.1} parent=5 // pred_check_branch
        %198 = sbr.rel (%p195) target = $region36
      $region35: #{tpu_custom_call.1} parent=5 // pred_region
        %s199 = ssub.s32 %s15, 1
        %s200 = smul.u32 32, %s20
        %p201 = scmp.lt.s32.totalorder %s200, 63
        %s202 = scalar_select %p201, %s200, 63
        %s203 = smul.addr %s202, 8
        %s204 = scalar_lea.vmem %s0, %s203
        %p205 = pneg %p41
        %p206 = pneg %p38
        %p207 = pneg %p62
        %p208 = pneg %p59
        %p209 = pneg %p83
        %p210 = pneg %p80
        %p211 = pneg %p104
        %p212 = pneg %p101
        %p213 = pneg %p130
        %p214 = pneg %p127
        %s215 = smul.u32 32, %s20
        %p216 = scmp.lt.s32.totalorder %s215, 63
        %s217 = scalar_select %p216, %s215, 63
        %s218 = smul.addr %s217, 8
        %s219 = scalar_lea.vmem %s4, %s218
        %p220 = pneg %p156
        %p221 = pneg %p153
        %s222 = sand.u32 %s143, 1
        %s223 = scalar_lea.sflag [#allocation3], %s222
        %s224 = sand.u32 %s143, 1
        %s225 = smul.addr %s224, 8
        %s226 = scalar_lea.vmem [#allocation2], %s225
        %s227 = smul.u32 32, %s20
        %p228 = scmp.lt.s32.totalorder %s227, 63
        %s229 = scalar_select %p228, %s227, 63
        %s230 = smul.addr %s229, 8
        %s231 = scalar_lea.vmem %s0, %s230
        %s232 = smul.u32 32, %s20
        %s233 = smul.u32 32, %s20
        %p234 = scmp.lt.s32.totalorder %s233, 63
        %s235 = scalar_select %p234, %s233, 63
        %s236 = smul.addr %s235, 8
        %s237 = scalar_lea.vmem %s4, %s236
        %s238 = smul.u32 32, %s20
        %v239 = vld [vmem:[%s231] sm:$0xff]
        %v240 = vld [vmem:[%s231 + $0x8] sm:$0xff]
        %v241 = vld [vmem:[%s231 + $0x10] sm:$0xff]
        %v242 = vld [vmem:[%s231 + $0x18] sm:$0xff]
        %v243 = vld [vmem:[%s231 + $0x20] sm:$0xff]
        %v244 = vld [vmem:[%s231 + $0x28] sm:$0xff]
        %v245 = vld [vmem:[%s231 + $0x30] sm:$0xff]
        %v246 = vld [vmem:[%s231 + $0x38] sm:$0xff]
        %v247 = vld [vmem:[%s231 + $0x40] sm:$0xff]
        %v248 = vld [vmem:[%s231 + $0x48] sm:$0xff]
        %v249 = vld [vmem:[%s231 + $0x50] sm:$0xff]
        %v250 = vld [vmem:[%s231 + $0x58] sm:$0xff]
        %v251 = vld [vmem:[%s231 + $0x60] sm:$0xff]
        %v252 = vld [vmem:[%s231 + $0x68] sm:$0xff]
        %v253 = vld [vmem:[%s231 + $0x70] sm:$0xff]
        %v254 = vld [vmem:[%s231 + $0x78] sm:$0xff]
        %v255 = vld [vmem:[%s231 + $0x80] sm:$0xff]
        %v256 = vld [vmem:[%s231 + $0x88] sm:$0xff]
        %v257 = vld [vmem:[%s231 + $0x90] sm:$0xff]
        %v258 = vld [vmem:[%s231 + $0x98] sm:$0xff]
        %v259 = vld [vmem:[%s231 + $0xa0] sm:$0xff]
        %v260 = vld [vmem:[%s231 + $0xa8] sm:$0xff]
        %v261 = vld [vmem:[%s231 + $0xb0] sm:$0xff]
        %v262 = vld [vmem:[%s231 + $0xb8] sm:$0xff]
        %v263 = vld [vmem:[%s231 + $0xc0] sm:$0xff]
        %v264 = vld [vmem:[%s231 + $0xc8] sm:$0xff]
        %v265 = vld [vmem:[%s231 + $0xd0] sm:$0xff]
        %v266 = vld [vmem:[%s231 + $0xd8] sm:$0xff]
        %v267 = vld [vmem:[%s231 + $0xe0] sm:$0xff]
        %v268 = vld [vmem:[%s231 + $0xe8] sm:$0xff]
        %v269 = vld [vmem:[%s231 + $0xf0] sm:$0xff]
        %v270 = vld [vmem:[%s231 + $0xf8] sm:$0xff]
        %v271 = vld [vmem:[%s1] sm:$0xff]
        %v272 = vld [vmem:[%s1 + $0x8] sm:$0xff]
        %v273 = vld [vmem:[%s1 + $0x10] sm:$0xff]
        %v274 = vld [vmem:[%s1 + $0x18] sm:$0xff]
        %v275 = vld [vmem:[%s3] sm:$0x1]
        %v277 = vperm.slane %v275, 0
        %vm279 = vcmask 261120
        %v281 = vsel %vm279, %v239, 0
        %v284 = vsel %vm279, %v240, 0
        %v287 = vsel %vm279, %v241, 0
        %v290 = vsel %vm279, %v242, 0
        %v293 = vsel %vm279, %v243, 0
        %v296 = vsel %vm279, %v244, 0
        %v299 = vsel %vm279, %v245, 0
        %v302 = vsel %vm279, %v246, 0
        %v305 = vsel %vm279, %v247, 0
        %v308 = vsel %vm279, %v248, 0
        %v311 = vsel %vm279, %v249, 0
        %v314 = vsel %vm279, %v250, 0
        %v317 = vsel %vm279, %v251, 0
        %v320 = vsel %vm279, %v252, 0
        %v323 = vsel %vm279, %v253, 0
        %v326 = vsel %vm279, %v254, 0
        %v329 = vsel %vm279, %v255, 0
        %v332 = vsel %vm279, %v256, 0
        %v335 = vsel %vm279, %v257, 0
        %v338 = vsel %vm279, %v258, 0
        %v341 = vsel %vm279, %v259, 0
        %v344 = vsel %vm279, %v260, 0
        %v347 = vsel %vm279, %v261, 0
        %v350 = vsel %vm279, %v262, 0
        %v353 = vsel %vm279, %v263, 0
        %v356 = vsel %vm279, %v264, 0
        %v359 = vsel %vm279, %v265, 0
        %v362 = vsel %vm279, %v266, 0
        %v365 = vsel %vm279, %v267, 0
        %v368 = vsel %vm279, %v268, 0
        %v371 = vsel %vm279, %v269, 0
        %v374 = vsel %vm279, %v270, 0
        %376 = vmatpush.msra.mxu0 0.0
        %377 = vmatpush.msra.mxu0 0.0
        %378 = vmatpush.msra.mxu0 0.0
        %379 = vmatpush.msra.mxu0 0.0
        %380 = vmatpush.msra.mxu0 0.0
        %381 = vmatpush.msra.mxu0 0.0
        %382 = vmatpush.msra.mxu0 0.0
        %383 = vmatpush.msra.mxu0 0.0
        %384 = vmatpush.msra.mxu0 0.0
        %385 = vmatpush.msra.mxu0 0.0
        %386 = vmatpush.msra.mxu0 0.0
        %387 = vmatpush.msra.mxu0 0.0
        %388 = vmatpush.msra.mxu0 %v274
        %389 = vmatpush.msra.mxu0 %v273
        %390 = vmatpush.msra.mxu0 %v272
        %391 = vmatpush.msra.mxu0 %v271
        %392 = vmatmul.f32.gmra.mxu0 %v281
        %v393 = vpop.f32.mrf.mxu0
        %v394 = vadd.f32 %v277, %v393
        %395 = vmatmul.f32.gmra.mxu0 %v284
        %v396 = vpop.f32.mrf.mxu0
        %v397 = vadd.f32 %v277, %v396
        %398 = vmatmul.f32.gmra.mxu0 %v287
        %v399 = vpop.f32.mrf.mxu0
        %v400 = vadd.f32 %v277, %v399
        %401 = vmatmul.f32.gmra.mxu0 %v290
        %v402 = vpop.f32.mrf.mxu0
        %v403 = vadd.f32 %v277, %v402
        %404 = vmatmul.f32.gmra.mxu0 %v293
        %v405 = vpop.f32.mrf.mxu0
        %v406 = vadd.f32 %v277, %v405
        %407 = vmatmul.f32.gmra.mxu0 %v296
        %v408 = vpop.f32.mrf.mxu0
        %v409 = vadd.f32 %v277, %v408
        %410 = vmatmul.f32.gmra.mxu0 %v299
        %v411 = vpop.f32.mrf.mxu0
        %v412 = vadd.f32 %v277, %v411
        %413 = vmatmul.f32.gmra.mxu0 %v302
        %v414 = vpop.f32.mrf.mxu0
        %v415 = vadd.f32 %v277, %v414
        %416 = vmatmul.f32.gmra.mxu0 %v305
        %v417 = vpop.f32.mrf.mxu0
        %v418 = vadd.f32 %v277, %v417
        %419 = vmatmul.f32.gmra.mxu0 %v308
        %v420 = vpop.f32.mrf.mxu0
        %v421 = vadd.f32 %v277, %v420
        %422 = vmatmul.f32.gmra.mxu0 %v311
        %v423 = vpop.f32.mrf.mxu0
        %v424 = vadd.f32 %v277, %v423
        %425 = vmatmul.f32.gmra.mxu0 %v314
        %v426 = vpop.f32.mrf.mxu0
        %v427 = vadd.f32 %v277, %v426
        %428 = vmatmul.f32.gmra.mxu0 %v317
        %v429 = vpop.f32.mrf.mxu0
        %v430 = vadd.f32 %v277, %v429
        %431 = vmatmul.f32.gmra.mxu0 %v320
        %v432 = vpop.f32.mrf.mxu0
        %v433 = vadd.f32 %v277, %v432
        %434 = vmatmul.f32.gmra.mxu0 %v323
        %v435 = vpop.f32.mrf.mxu0
        %v436 = vadd.f32 %v277, %v435
        %437 = vmatmul.f32.gmra.mxu0 %v326
        %v438 = vpop.f32.mrf.mxu0
        %v439 = vadd.f32 %v277, %v438
        %440 = vmatmul.f32.gmra.mxu0 %v329
        %v441 = vpop.f32.mrf.mxu0
        %v442 = vadd.f32 %v277, %v441
        %443 = vmatmul.f32.gmra.mxu0 %v332
        %v444 = vpop.f32.mrf.mxu0
        %v445 = vadd.f32 %v277, %v444
        %446 = vmatmul.f32.gmra.mxu0 %v335
        %v447 = vpop.f32.mrf.mxu0
        %v448 = vadd.f32 %v277, %v447
        %449 = vmatmul.f32.gmra.mxu0 %v338
        %v450 = vpop.f32.mrf.mxu0
        %v451 = vadd.f32 %v277, %v450
        %452 = vmatmul.f32.gmra.mxu0 %v341
        %v453 = vpop.f32.mrf.mxu0
        %v454 = vadd.f32 %v277, %v453
        %455 = vmatmul.f32.gmra.mxu0 %v344
        %v456 = vpop.f32.mrf.mxu0
        %v457 = vadd.f32 %v277, %v456
        %458 = vmatmul.f32.gmra.mxu0 %v347
        %v459 = vpop.f32.mrf.mxu0
        %v460 = vadd.f32 %v277, %v459
        %461 = vmatmul.f32.gmra.mxu0 %v350
        %v462 = vpop.f32.mrf.mxu0
        %v463 = vadd.f32 %v277, %v462
        %464 = vmatmul.f32.gmra.mxu0 %v353
        %v465 = vpop.f32.mrf.mxu0
        %v466 = vadd.f32 %v277, %v465
        %467 = vmatmul.f32.gmra.mxu0 %v356
        %v468 = vpop.f32.mrf.mxu0
        %v469 = vadd.f32 %v277, %v468
        %470 = vmatmul.f32.gmra.mxu0 %v359
        %v471 = vpop.f32.mrf.mxu0
        %v472 = vadd.f32 %v277, %v471
        %473 = vmatmul.f32.gmra.mxu0 %v362
        %v474 = vpop.f32.mrf.mxu0
        %v475 = vadd.f32 %v277, %v474
        %476 = vmatmul.f32.gmra.mxu0 %v365
        %v477 = vpop.f32.mrf.mxu0
        %v478 = vadd.f32 %v277, %v477
        %479 = vmatmul.f32.gmra.mxu0 %v368
        %v480 = vpop.f32.mrf.mxu0
        %v481 = vadd.f32 %v277, %v480
        %482 = vmatmul.f32.gmra.mxu0 %v371
        %v483 = vpop.f32.mrf.mxu0
        %v484 = vadd.f32 %v277, %v483
        %485 = vmatmul.f32.gmra.mxu0 %v374
        %v486 = vpop.f32.mrf.mxu0
        %v487 = vadd.f32 %v277, %v486
        %488 = vdwg.mxu0
        %489 = vmin.index.xlane.f32.xlu0 %v394
        %v490 = vpop.xlane.xlu0 %489
        %491 = vmin.index.xlane.f32.xlu0 %v397
        %v492 = vpop.xlane.xlu0 %491
        %493 = vmin.index.xlane.f32.xlu0 %v400
        %v494 = vpop.xlane.xlu0 %493
        %495 = vmin.index.xlane.f32.xlu0 %v403
        %v496 = vpop.xlane.xlu0 %495
        %497 = vmin.index.xlane.f32.xlu0 %v406
        %v498 = vpop.xlane.xlu0 %497
        %499 = vmin.index.xlane.f32.xlu0 %v409
        %v500 = vpop.xlane.xlu0 %499
        %501 = vmin.index.xlane.f32.xlu0 %v412
        %v502 = vpop.xlane.xlu0 %501
        %503 = vmin.index.xlane.f32.xlu0 %v415
        %v504 = vpop.xlane.xlu0 %503
        %505 = vmin.index.xlane.f32.xlu0 %v418
        %v506 = vpop.xlane.xlu0 %505
        %507 = vmin.index.xlane.f32.xlu0 %v421
        %v508 = vpop.xlane.xlu0 %507
        %509 = vmin.index.xlane.f32.xlu0 %v424
        %v510 = vpop.xlane.xlu0 %509
        %511 = vmin.index.xlane.f32.xlu0 %v427
        %v512 = vpop.xlane.xlu0 %511
        %513 = vmin.index.xlane.f32.xlu0 %v430
        %v514 = vpop.xlane.xlu0 %513
        %515 = vmin.index.xlane.f32.xlu0 %v433
        %v516 = vpop.xlane.xlu0 %515
        %517 = vmin.index.xlane.f32.xlu0 %v436
        %v518 = vpop.xlane.xlu0 %517
        %519 = vmin.index.xlane.f32.xlu0 %v439
        %v520 = vpop.xlane.xlu0 %519
        %521 = vmin.index.xlane.f32.xlu0 %v442
        %v522 = vpop.xlane.xlu0 %521
        %523 = vmin.index.xlane.f32.xlu0 %v445
        %v524 = vpop.xlane.xlu0 %523
        %525 = vmin.index.xlane.f32.xlu0 %v448
        %v526 = vpop.xlane.xlu0 %525
        %527 = vmin.index.xlane.f32.xlu0 %v451
        %v528 = vpop.xlane.xlu0 %527
        %529 = vmin.index.xlane.f32.xlu0 %v454
        %v530 = vpop.xlane.xlu0 %529
        %531 = vmin.index.xlane.f32.xlu0 %v457
        %v532 = vpop.xlane.xlu0 %531
        %533 = vmin.index.xlane.f32.xlu0 %v460
        %v534 = vpop.xlane.xlu0 %533
        %535 = vmin.index.xlane.f32.xlu0 %v463
        %v536 = vpop.xlane.xlu0 %535
        %537 = vmin.index.xlane.f32.xlu0 %v466
        %v538 = vpop.xlane.xlu0 %537
        %539 = vmin.index.xlane.f32.xlu0 %v469
        %v540 = vpop.xlane.xlu0 %539
        %541 = vmin.index.xlane.f32.xlu0 %v472
        %v542 = vpop.xlane.xlu0 %541
        %543 = vmin.index.xlane.f32.xlu0 %v475
        %v544 = vpop.xlane.xlu0 %543
        %545 = vmin.index.xlane.f32.xlu0 %v478
        %v546 = vpop.xlane.xlu0 %545
        %547 = vmin.index.xlane.f32.xlu0 %v481
        %v548 = vpop.xlane.xlu0 %547
        %549 = vmin.index.xlane.f32.xlu0 %v484
        %v550 = vpop.xlane.xlu0 %549
        %551 = vmin.index.xlane.f32.xlu0 %v487
        %v552 = vpop.xlane.xlu0 %551
        %v553 = vlaneseq
        %v554 = vand.u32 %v553, 127
        %vm555 = vcmp.eq.s32.totalorder %v554, %v490
        %vm556 = vcmp.eq.s32.totalorder %v554, %v492
        %vm557 = vcmp.eq.s32.totalorder %v554, %v494
        %vm558 = vcmp.eq.s32.totalorder %v554, %v496
        %vm559 = vcmp.eq.s32.totalorder %v554, %v498
        %vm560 = vcmp.eq.s32.totalorder %v554, %v500
        %vm561 = vcmp.eq.s32.totalorder %v554, %v502
        %vm562 = vcmp.eq.s32.totalorder %v554, %v504
        %vm563 = vcmp.eq.s32.totalorder %v554, %v506
        %vm564 = vcmp.eq.s32.totalorder %v554, %v508
        %vm565 = vcmp.eq.s32.totalorder %v554, %v510
        %vm566 = vcmp.eq.s32.totalorder %v554, %v512
        %vm567 = vcmp.eq.s32.totalorder %v554, %v514
        %vm568 = vcmp.eq.s32.totalorder %v554, %v516
        %vm569 = vcmp.eq.s32.totalorder %v554, %v518
        %vm570 = vcmp.eq.s32.totalorder %v554, %v520
        %vm571 = vcmp.eq.s32.totalorder %v554, %v522
        %vm572 = vcmp.eq.s32.totalorder %v554, %v524
        %vm573 = vcmp.eq.s32.totalorder %v554, %v526
        %vm574 = vcmp.eq.s32.totalorder %v554, %v528
        %vm575 = vcmp.eq.s32.totalorder %v554, %v530
        %vm576 = vcmp.eq.s32.totalorder %v554, %v532
        %vm577 = vcmp.eq.s32.totalorder %v554, %v534
        %vm578 = vcmp.eq.s32.totalorder %v554, %v536
        %vm579 = vcmp.eq.s32.totalorder %v554, %v538
        %vm580 = vcmp.eq.s32.totalorder %v554, %v540
        %vm581 = vcmp.eq.s32.totalorder %v554, %v542
        %vm582 = vcmp.eq.s32.totalorder %v554, %v544
        %vm583 = vcmp.eq.s32.totalorder %v554, %v546
        %vm584 = vcmp.eq.s32.totalorder %v554, %v548
        %vm585 = vcmp.eq.s32.totalorder %v554, %v550
        %vm586 = vcmp.eq.s32.totalorder %v554, %v552
        %v587 = vsel %vm555, 1, 0
        %v588 = vsel %vm556, 1, 0
        %v589 = vsel %vm557, 1, 0
        %v590 = vsel %vm558, 1, 0
        %v591 = vsel %vm559, 1, 0
        %v592 = vsel %vm560, 1, 0
        %v593 = vsel %vm561, 1, 0
        %v594 = vsel %vm562, 1, 0
        %v595 = vsel %vm563, 1, 0
        %v596 = vsel %vm564, 1, 0
        %v597 = vsel %vm565, 1, 0
        %v598 = vsel %vm566, 1, 0
        %v599 = vsel %vm567, 1, 0
        %v600 = vsel %vm568, 1, 0
        %v601 = vsel %vm569, 1, 0
        %v602 = vsel %vm570, 1, 0
        %v603 = vsel %vm571, 1, 0
        %v604 = vsel %vm572, 1, 0
        %v605 = vsel %vm573, 1, 0
        %v606 = vsel %vm574, 1, 0
        %v607 = vsel %vm575, 1, 0
        %v608 = vsel %vm576, 1, 0
        %v609 = vsel %vm577, 1, 0
        %v610 = vsel %vm578, 1, 0
        %v611 = vsel %vm579, 1, 0
        %v612 = vsel %vm580, 1, 0
        %v613 = vsel %vm581, 1, 0
        %v614 = vsel %vm582, 1, 0
        %v615 = vsel %vm583, 1, 0
        %v616 = vsel %vm584, 1, 0
        %v617 = vsel %vm585, 1, 0
        %v618 = vsel %vm586, 1, 0
        %v619 = vcvt.s32.f32 %v587
        %v620 = vcvt.s32.f32 %v588
        %v621 = vcvt.s32.f32 %v589
        %v622 = vcvt.s32.f32 %v590
        %v623 = vcvt.s32.f32 %v591
        %v624 = vcvt.s32.f32 %v592
        %v625 = vcvt.s32.f32 %v593
        %v626 = vcvt.s32.f32 %v594
        %v627 = vcvt.s32.f32 %v595
        %v628 = vcvt.s32.f32 %v596
        %v629 = vcvt.s32.f32 %v597
        %v630 = vcvt.s32.f32 %v598
        %v631 = vcvt.s32.f32 %v599
        %v632 = vcvt.s32.f32 %v600
        %v633 = vcvt.s32.f32 %v601
        %v634 = vcvt.s32.f32 %v602
        %v635 = vcvt.s32.f32 %v603
        %v636 = vcvt.s32.f32 %v604
        %v637 = vcvt.s32.f32 %v605
        %v638 = vcvt.s32.f32 %v606
        %v639 = vcvt.s32.f32 %v607
        %v640 = vcvt.s32.f32 %v608
        %v641 = vcvt.s32.f32 %v609
        %v642 = vcvt.s32.f32 %v610
        %v643 = vcvt.s32.f32 %v611
        %v644 = vcvt.s32.f32 %v612
        %v645 = vcvt.s32.f32 %v613
        %v646 = vcvt.s32.f32 %v614
        %v647 = vcvt.s32.f32 %v615
        %v648 = vcvt.s32.f32 %v616
        %v649 = vcvt.s32.f32 %v617
        %v650 = vcvt.s32.f32 %v618
        %v651 = vld [vmem:[%s2] sm:$0xff]
        %v652 = vld [vmem:[%s2 + $0x8] sm:$0xff]
        %v653 = vld [vmem:[%s2 + $0x10] sm:$0xff]
        %v654 = vld [vmem:[%s2 + $0x18] sm:$0xff]
        %v655 = vld [vmem:[%s2 + $0x20] sm:$0xff]
        %v656 = vld [vmem:[%s2 + $0x28] sm:$0xff]
        %v657 = vld [vmem:[%s2 + $0x30] sm:$0xff]
        %v658 = vld [vmem:[%s2 + $0x38] sm:$0xff]
        %v659 = vld [vmem:[%s2 + $0x40] sm:$0xff]
        %v660 = vld [vmem:[%s2 + $0x48] sm:$0xff]
        %v661 = vld [vmem:[%s2 + $0x50] sm:$0xff]
        %v662 = vld [vmem:[%s2 + $0x58] sm:$0xff]
        %v663 = vld [vmem:[%s2 + $0x60] sm:$0xff]
        %v664 = vld [vmem:[%s2 + $0x68] sm:$0xff]
        %v665 = vld [vmem:[%s2 + $0x70] sm:$0xff]
        %v666 = vld [vmem:[%s2 + $0x78] sm:$0xff]
        %667 = vmatpush.msra.mxu0 %v666
        %668 = vmatpush.msra.mxu0 %v665
        %669 = vmatpush.msra.mxu0 %v664
        %670 = vmatpush.msra.mxu0 %v663
        %671 = vmatpush.msra.mxu0 %v662
        %672 = vmatpush.msra.mxu0 %v661
        %673 = vmatpush.msra.mxu0 %v660
        %674 = vmatpush.msra.mxu0 %v659
        %675 = vmatpush.msra.mxu0 %v658
        %676 = vmatpush.msra.mxu0 %v657
        %677 = vmatpush.msra.mxu0 %v656
        %678 = vmatpush.msra.mxu0 %v655
        %679 = vmatpush.msra.mxu0 %v654
        %680 = vmatpush.msra.mxu0 %v653
        %681 = vmatpush.msra.mxu0 %v652
        %682 = vmatpush.msra.mxu0 %v651
        %683 = vmatmul.f32.gmra.mxu0 %v619
        %v684 = vpop.f32.mrf.mxu0
        %v685 = vadd.f32 0.0, %v684
        %686 = vmatmul.f32.gmra.mxu0 %v620
        %v687 = vpop.f32.mrf.mxu0
        %v688 = vadd.f32 0.0, %v687
        %689 = vmatmul.f32.gmra.mxu0 %v621
        %v690 = vpop.f32.mrf.mxu0
        %v691 = vadd.f32 0.0, %v690
        %692 = vmatmul.f32.gmra.mxu0 %v622
        %v693 = vpop.f32.mrf.mxu0
        %v694 = vadd.f32 0.0, %v693
        %695 = vmatmul.f32.gmra.mxu0 %v623
        %v696 = vpop.f32.mrf.mxu0
        %v697 = vadd.f32 0.0, %v696
        %698 = vmatmul.f32.gmra.mxu0 %v624
        %v699 = vpop.f32.mrf.mxu0
        %v700 = vadd.f32 0.0, %v699
        %701 = vmatmul.f32.gmra.mxu0 %v625
        %v702 = vpop.f32.mrf.mxu0
        %v703 = vadd.f32 0.0, %v702
        %704 = vmatmul.f32.gmra.mxu0 %v626
        %v705 = vpop.f32.mrf.mxu0
        %v706 = vadd.f32 0.0, %v705
        %707 = vmatmul.f32.gmra.mxu0 %v627
        %v708 = vpop.f32.mrf.mxu0
        %v709 = vadd.f32 0.0, %v708
        %710 = vmatmul.f32.gmra.mxu0 %v628
        %v711 = vpop.f32.mrf.mxu0
        %v712 = vadd.f32 0.0, %v711
        %713 = vmatmul.f32.gmra.mxu0 %v629
        %v714 = vpop.f32.mrf.mxu0
        %v715 = vadd.f32 0.0, %v714
        %716 = vmatmul.f32.gmra.mxu0 %v630
        %v717 = vpop.f32.mrf.mxu0
        %v718 = vadd.f32 0.0, %v717
        %719 = vmatmul.f32.gmra.mxu0 %v631
        %v720 = vpop.f32.mrf.mxu0
        %v721 = vadd.f32 0.0, %v720
        %722 = vmatmul.f32.gmra.mxu0 %v632
        %v723 = vpop.f32.mrf.mxu0
        %v724 = vadd.f32 0.0, %v723
        %725 = vmatmul.f32.gmra.mxu0 %v633
        %v726 = vpop.f32.mrf.mxu0
        %v727 = vadd.f32 0.0, %v726
        %728 = vmatmul.f32.gmra.mxu0 %v634
        %v729 = vpop.f32.mrf.mxu0
        %v730 = vadd.f32 0.0, %v729
        %731 = vmatmul.f32.gmra.mxu0 %v635
        %v732 = vpop.f32.mrf.mxu0
        %v733 = vadd.f32 0.0, %v732
        %734 = vmatmul.f32.gmra.mxu0 %v636
        %v735 = vpop.f32.mrf.mxu0
        %v736 = vadd.f32 0.0, %v735
        %737 = vmatmul.f32.gmra.mxu0 %v637
        %v738 = vpop.f32.mrf.mxu0
        %v739 = vadd.f32 0.0, %v738
        %740 = vmatmul.f32.gmra.mxu0 %v638
        %v741 = vpop.f32.mrf.mxu0
        %v742 = vadd.f32 0.0, %v741
        %743 = vmatmul.f32.gmra.mxu0 %v639
        %v744 = vpop.f32.mrf.mxu0
        %v745 = vadd.f32 0.0, %v744
        %746 = vmatmul.f32.gmra.mxu0 %v640
        %v747 = vpop.f32.mrf.mxu0
        %v748 = vadd.f32 0.0, %v747
        %749 = vmatmul.f32.gmra.mxu0 %v641
        %v750 = vpop.f32.mrf.mxu0
        %v751 = vadd.f32 0.0, %v750
        %752 = vmatmul.f32.gmra.mxu0 %v642
        %v753 = vpop.f32.mrf.mxu0
        %v754 = vadd.f32 0.0, %v753
        %755 = vmatmul.f32.gmra.mxu0 %v643
        %v756 = vpop.f32.mrf.mxu0
        %v757 = vadd.f32 0.0, %v756
        %758 = vmatmul.f32.gmra.mxu0 %v644
        %v759 = vpop.f32.mrf.mxu0
        %v760 = vadd.f32 0.0, %v759
        %761 = vmatmul.f32.gmra.mxu0 %v645
        %v762 = vpop.f32.mrf.mxu0
        %v763 = vadd.f32 0.0, %v762
        %764 = vmatmul.f32.gmra.mxu0 %v646
        %v765 = vpop.f32.mrf.mxu0
        %v766 = vadd.f32 0.0, %v765
        %767 = vmatmul.f32.gmra.mxu0 %v647
        %v768 = vpop.f32.mrf.mxu0
        %v769 = vadd.f32 0.0, %v768
        %770 = vmatmul.f32.gmra.mxu0 %v648
        %v771 = vpop.f32.mrf.mxu0
        %v772 = vadd.f32 0.0, %v771
        %773 = vmatmul.f32.gmra.mxu0 %v649
        %v774 = vpop.f32.mrf.mxu0
        %v775 = vadd.f32 0.0, %v774
        %776 = vmatmul.f32.gmra.mxu0 %v650
        %v777 = vpop.f32.mrf.mxu0
        %v778 = vadd.f32 0.0, %v777
        %779 = vdwg.mxu0
        %780 = vst.msk [vmem:[%s237] sm:$0xff] %vm279, %v685
        %781 = vst.msk [vmem:[%s237 + $0x8] sm:$0xff] %vm279, %v688
        %782 = vst.msk [vmem:[%s237 + $0x10] sm:$0xff] %vm279, %v691
        %783 = vst.msk [vmem:[%s237 + $0x18] sm:$0xff] %vm279, %v694
        %784 = vst.msk [vmem:[%s237 + $0x20] sm:$0xff] %vm279, %v697
        %785 = vst.msk [vmem:[%s237 + $0x28] sm:$0xff] %vm279, %v700
        %786 = vst.msk [vmem:[%s237 + $0x30] sm:$0xff] %vm279, %v703
        %787 = vst.msk [vmem:[%s237 + $0x38] sm:$0xff] %vm279, %v706
        %788 = vst.msk [vmem:[%s237 + $0x40] sm:$0xff] %vm279, %v709
        %789 = vst.msk [vmem:[%s237 + $0x48] sm:$0xff] %vm279, %v712
        %790 = vst.msk [vmem:[%s237 + $0x50] sm:$0xff] %vm279, %v715
        %791 = vst.msk [vmem:[%s237 + $0x58] sm:$0xff] %vm279, %v718
        %792 = vst.msk [vmem:[%s237 + $0x60] sm:$0xff] %vm279, %v721
        %793 = vst.msk [vmem:[%s237 + $0x68] sm:$0xff] %vm279, %v724
        %794 = vst.msk [vmem:[%s237 + $0x70] sm:$0xff] %vm279, %v727
        %795 = vst.msk [vmem:[%s237 + $0x78] sm:$0xff] %vm279, %v730
        %796 = vst.msk [vmem:[%s237 + $0x80] sm:$0xff] %vm279, %v733
        %797 = vst.msk [vmem:[%s237 + $0x88] sm:$0xff] %vm279, %v736
        %798 = vst.msk [vmem:[%s237 + $0x90] sm:$0xff] %vm279, %v739
        %799 = vst.msk [vmem:[%s237 + $0x98] sm:$0xff] %vm279, %v742
        %800 = vst.msk [vmem:[%s237 + $0xa0] sm:$0xff] %vm279, %v745
        %801 = vst.msk [vmem:[%s237 + $0xa8] sm:$0xff] %vm279, %v748
        %802 = vst.msk [vmem:[%s237 + $0xb0] sm:$0xff] %vm279, %v751
        %803 = vst.msk [vmem:[%s237 + $0xb8] sm:$0xff] %vm279, %v754
        %804 = vst.msk [vmem:[%s237 + $0xc0] sm:$0xff] %vm279, %v757
        %805 = vst.msk [vmem:[%s237 + $0xc8] sm:$0xff] %vm279, %v760
        %806 = vst.msk [vmem:[%s237 + $0xd0] sm:$0xff] %vm279, %v763
        %807 = vst.msk [vmem:[%s237 + $0xd8] sm:$0xff] %vm279, %v766
        %808 = vst.msk [vmem:[%s237 + $0xe0] sm:$0xff] %vm279, %v769
        %809 = vst.msk [vmem:[%s237 + $0xe8] sm:$0xff] %vm279, %v772
        %810 = vst.msk [vmem:[%s237 + $0xf0] sm:$0xff] %vm279, %v775
        %811 = vst.msk [vmem:[%s237 + $0xf8] sm:$0xff] %vm279, %v778
        %v812 = vsub.f32 %v685, %v239
        %v813 = vsub.f32 %v688, %v240
        %v814 = vsub.f32 %v691, %v241
        %v815 = vsub.f32 %v694, %v242
        %v816 = vsub.f32 %v697, %v243
        %v817 = vsub.f32 %v700, %v244
        %v818 = vsub.f32 %v703, %v245
        %v819 = vsub.f32 %v706, %v246
        %v820 = vsub.f32 %v709, %v247
        %v821 = vsub.f32 %v712, %v248
        %v822 = vsub.f32 %v715, %v249
        %v823 = vsub.f32 %v718, %v250
        %v824 = vsub.f32 %v721, %v251
        %v825 = vsub.f32 %v724, %v252
        %v826 = vsub.f32 %v727, %v253
        %v827 = vsub.f32 %v730, %v254
        %v828 = vsub.f32 %v733, %v255
        %v829 = vsub.f32 %v736, %v256
        %v830 = vsub.f32 %v739, %v257
        %v831 = vsub.f32 %v742, %v258
        %v832 = vsub.f32 %v745, %v259
        %v833 = vsub.f32 %v748, %v260
        %v834 = vsub.f32 %v751, %v261
        %v835 = vsub.f32 %v754, %v262
        %v836 = vsub.f32 %v757, %v263
        %v837 = vsub.f32 %v760, %v264
        %v838 = vsub.f32 %v763, %v265
        %v839 = vsub.f32 %v766, %v266
        %v840 = vsub.f32 %v769, %v267
        %v841 = vsub.f32 %v772, %v268
        %v842 = vsub.f32 %v775, %v269
        %v843 = vsub.f32 %v778, %v270
        %v844 = vmul.f32 %v812, %v812
        %v845 = vmul.f32 %v813, %v813
        %v846 = vmul.f32 %v814, %v814
        %v847 = vmul.f32 %v815, %v815
        %v848 = vmul.f32 %v816, %v816
        %v849 = vmul.f32 %v817, %v817
        %v850 = vmul.f32 %v818, %v818
        %v851 = vmul.f32 %v819, %v819
        %v852 = vmul.f32 %v820, %v820
        %v853 = vmul.f32 %v821, %v821
        %v854 = vmul.f32 %v822, %v822
        %v855 = vmul.f32 %v823, %v823
        %v856 = vmul.f32 %v824, %v824
        %v857 = vmul.f32 %v825, %v825
        %v858 = vmul.f32 %v826, %v826
        %v859 = vmul.f32 %v827, %v827
        %v860 = vmul.f32 %v828, %v828
        %v861 = vmul.f32 %v829, %v829
        %v862 = vmul.f32 %v830, %v830
        %v863 = vmul.f32 %v831, %v831
        %v864 = vmul.f32 %v832, %v832
        %v865 = vmul.f32 %v833, %v833
        %v866 = vmul.f32 %v834, %v834
        %v867 = vmul.f32 %v835, %v835
        %v868 = vmul.f32 %v836, %v836
        %v869 = vmul.f32 %v837, %v837
        %v870 = vmul.f32 %v838, %v838
        %v871 = vmul.f32 %v839, %v839
        %v872 = vmul.f32 %v840, %v840
        %v873 = vmul.f32 %v841, %v841
        %v874 = vmul.f32 %v842, %v842
        %v875 = vmul.f32 %v843, %v843
        %v876 = vsel %vm279, %v844, 0.0
        %v877 = vsel %vm279, %v845, 0.0
        %v878 = vadd.f32 %v876, %v877
        %v879 = vsel %vm279, %v846, 0.0
        %v880 = vadd.f32 %v878, %v879
        %v881 = vsel %vm279, %v847, 0.0
        %v882 = vadd.f32 %v880, %v881
        %v883 = vsel %vm279, %v848, 0.0
        %v884 = vadd.f32 %v882, %v883
        %v885 = vsel %vm279, %v849, 0.0
        %v886 = vadd.f32 %v884, %v885
        %v887 = vsel %vm279, %v850, 0.0
        %v888 = vadd.f32 %v886, %v887
        %v889 = vsel %vm279, %v851, 0.0
        %v890 = vadd.f32 %v888, %v889
        %v891 = vsel %vm279, %v852, 0.0
        %v892 = vadd.f32 %v890, %v891
        %v893 = vsel %vm279, %v853, 0.0
        %v894 = vadd.f32 %v892, %v893
        %v895 = vsel %vm279, %v854, 0.0
        %v896 = vadd.f32 %v894, %v895
        %v897 = vsel %vm279, %v855, 0.0
        %v898 = vadd.f32 %v896, %v897
        %v899 = vsel %vm279, %v856, 0.0
        %v900 = vadd.f32 %v898, %v899
        %v901 = vsel %vm279, %v857, 0.0
        %v902 = vadd.f32 %v900, %v901
        %v903 = vsel %vm279, %v858, 0.0
        %v904 = vadd.f32 %v902, %v903
        %v905 = vsel %vm279, %v859, 0.0
        %v906 = vadd.f32 %v904, %v905
        %v907 = vsel %vm279, %v860, 0.0
        %v908 = vadd.f32 %v906, %v907
        %v909 = vsel %vm279, %v861, 0.0
        %v910 = vadd.f32 %v908, %v909
        %v911 = vsel %vm279, %v862, 0.0
        %v912 = vadd.f32 %v910, %v911
        %v913 = vsel %vm279, %v863, 0.0
        %v914 = vadd.f32 %v912, %v913
        %v915 = vsel %vm279, %v864, 0.0
        %v916 = vadd.f32 %v914, %v915
        %v917 = vsel %vm279, %v865, 0.0
        %v918 = vadd.f32 %v916, %v917
        %v919 = vsel %vm279, %v866, 0.0
        %v920 = vadd.f32 %v918, %v919
        %v921 = vsel %vm279, %v867, 0.0
        %v922 = vadd.f32 %v920, %v921
        %v923 = vsel %vm279, %v868, 0.0
        %v924 = vadd.f32 %v922, %v923
        %v925 = vsel %vm279, %v869, 0.0
        %v926 = vadd.f32 %v924, %v925
        %v927 = vsel %vm279, %v870, 0.0
        %v928 = vadd.f32 %v926, %v927
        %v929 = vsel %vm279, %v871, 0.0
        %v930 = vadd.f32 %v928, %v929
        %v931 = vsel %vm279, %v872, 0.0
        %v932 = vadd.f32 %v930, %v931
        %v933 = vsel %vm279, %v873, 0.0
        %v934 = vadd.f32 %v932, %v933
        %v935 = vsel %vm279, %v874, 0.0
        %v936 = vadd.f32 %v934, %v935
        %v937 = vsel %vm279, %v875, 0.0
        %v938 = vadd.f32 %v936, %v937
        %939 = vadd.xlane.f32.xlu0 %v938
        %v940 = vpop.xlane.xlu0 %939
        %v941 = vrot.slane %v940, 4
        %v942 = vadd.f32 %v940, %v941
        %v943 = vrot.slane %v942, 2
        %v944 = vadd.f32 %v942, %v943
        %v945 = vrot.slane %v944, 1
        %v946 = vadd.f32 %v944, %v945
        %s947 = vtos %v946
        %v948 = vstv %s947
        %949 = vst [vmem:[%s226] sm:$0xff] %v948
        %s950 = smul.u32 32, %s20
        %p951 = scmp.lt.s32.totalorder %s950, 63
        %s952 = scalar_select %p951, %s950, 63
        %s953 = smul.addr %s952, 8
        %s954 = scalar_lea.vmem %s4, %s953
        %s955 = sand.u32 %s143, 1
        %s956 = scalar_lea.sflag [#allocation3], %s955
        %s957 = sand.u32 %s143, 1
        %s958 = smul.addr %s957, 8
        %s959 = scalar_lea.vmem [#allocation2], %s958
        // Predicated region
        $region37: #{tpu_custom_call.1} parent=35 // pred_check
          %p960 = pneg %p127
        $region38: #{tpu_custom_call.1} parent=35 // pred_check_branch
          %962 = sbr.rel (%p960) target = $region40
        $region39: #{tpu_custom_call.1} parent=35 // pred_region
          %s963 = smul.u32 32, %s20
        $region40: #{tpu_custom_call.1} parent=35 // pred_fallthru
          _
        // Predicated region
        $region41: #{tpu_custom_call.1} parent=35 // pred_check
          %p964 = pneg %p153
        $region42: #{tpu_custom_call.1} parent=35 // pred_check_branch
          %966 = sbr.rel (%p964) target = $region44
        $region43: #{tpu_custom_call.1} parent=35 // pred_region
          %968 = vsyncadd %s956, 0
          %s969 = smul.addr %s20, 8
          %s970 = scalar_lea.hbm %s5, %s969
          %s972 = sshll.u32 %s959, 4
          %s973 = int_to_ptr.vmem [resolvable:$true] %s972
          %s974 = sshll.u32 %s970, 4
          %s975 = int_to_ptr.hbm [resolvable:$true] %s974
          %977 = dma.vmem_to_hbm [thread:$0]  %s973, 128, %s975, %s956
        $region44: #{tpu_custom_call.1} parent=35 // pred_fallthru
          _
      $region36: #{tpu_custom_call.1} parent=5 // pred_fallthru
        _
      %p978 = scmp.le.s32.totalorder 2, %s15
      // Predicated region
      $region45: #{tpu_custom_call.1} parent=5 // pred_check
        %p979 = pneg %p978
      $region46: #{tpu_custom_call.1} parent=5 // pred_check_branch
        %981 = sbr.rel (%p979) target = $region48
      $region47: #{tpu_custom_call.1} parent=5 // pred_region
        %s982 = ssub.s32 %s15, 2
        // Predicated region
        $region49: #{tpu_custom_call.1} parent=47 // pred_check
          %p983 = pneg %p133
        $region50: #{tpu_custom_call.1} parent=47 // pred_check_branch
          %985 = sbr.rel (%p983) target = $region52
        $region51: #{tpu_custom_call.1} parent=47 // pred_region
          %s986 = smul.u32 32, %s21
          %p987 = scmp.lt.s32.totalorder %s986, 63
          %s988 = scalar_select %p987, %s986, 63
          %s989 = smul.addr %s988, 8
          %s990 = scalar_lea.vmem %s4, %s989
        $region52: #{tpu_custom_call.1} parent=47 // pred_fallthru
          _
        // Predicated region
        $region53: #{tpu_custom_call.1} parent=47 // pred_check
          %p991 = pneg %p159
        $region54: #{tpu_custom_call.1} parent=47 // pred_check_branch
          %993 = sbr.rel (%p991) target = $region56
        $region55: #{tpu_custom_call.1} parent=47 // pred_region
          %s994 = sand.u32 %s144, 1
          %s995 = scalar_lea.sflag [#allocation3], %s994
          %s996 = sand.u32 %s144, 1
          %s997 = smul.addr %s996, 8
          %s998 = scalar_lea.vmem [#allocation2], %s997
          %1000 = dma.done %s995, 128
        $region56: #{tpu_custom_call.1} parent=47 // pred_fallthru
          _
      $region48: #{tpu_custom_call.1} parent=5 // pred_fallthru
        _
    $region6: #{tpu_custom_call.1} parent=1 // loop_footer
      %s19 = sadd.s32 1, %s15
    $region7: #{tpu_custom_call.1} parent=1 // loop_footer_branch
      %14 = sbr.rel target = $region3
    $region8: #{tpu_custom_call.1} parent=1 // loop_exit
      _
    %1001 = vsyncpa [#allocation3], 1
    %s1002 = scalar_lea.sflag [#allocation3], 1
    %1003 = vsyncpa %s1002, 1

</llo_original>
